<compile_context>
chip_gen: v5e
topology: v5e:2x2
jax: 0.10.0
libtpu: 0.0.40
codegen_flags: <defaults>
</compile_context>

<pallas_src>
import functools

import jax
import jax.numpy as jnp
from jax.experimental import pallas as pl
from jax.experimental.pallas import tpu as pltpu


def _round_up(x, m):
    return ((x + m - 1) // m) * m


def _cdiv(a, b):
    return -(-a // b)


def _vmem_budget_bytes():
    """Generation-aware VMEM budget: ~3/4 of physical per-TC VMEM."""
    try:
        cap = pltpu.get_tpu_info().vmem_capacity_bytes
    except Exception:
        cap = 64 * 1024 * 1024  # conservative (v7x-sized) fallback
    return int(cap * 3 // 4)


# ---------------------------------------------------------------------------
# Kernel
# ---------------------------------------------------------------------------
def _mlp_gate_kernel(x_ref, w_ref, p_ref, o_ref, *scratch, eps, n_valid):
    """One (row_tile, k_tile) step of fused Linear + LayerNorm + sigmoid.

    x_ref:  (TR, TK)   activations tile
    w_ref:  (TK, Np)   pre-transposed (K, N) weight tile (N padded to 128)
    p_ref:  (3, Np)    packed [linear bias; ln gamma; ln beta]
    o_ref:  (TR, Np)   output tile (resident across the K axis)
    scratch: optionally one (TR, Np) f32 accumulator.  For f32 outputs we
             accumulate directly into o_ref and pass no scratch.
    """
    acc_ref = scratch[0] if scratch else o_ref
    k = pl.program_id(1)

    prod = jnp.dot(x_ref[...], w_ref[...], preferred_element_type=jnp.float32)

    @pl.when(k == 0)
    def _():
        acc_ref[...] = prod.astype(acc_ref.dtype)      # no zero-init + add

    @pl.when(k > 0)
    def _():
        acc_ref[...] += prod.astype(acc_ref.dtype)

    @pl.when(k == pl.num_programs(1) - 1)
    def _():
        h = acc_ref[...].astype(jnp.float32) + p_ref[0:1, :].astype(jnp.float32)
        n_pad = h.shape[-1]
        inv_n = 1.0 / float(n_valid)
        # Padded output columns are exactly zero (zero weight columns + zero
        # bias), so sum over all Np columns == sum over the valid N columns.
        u = jnp.sum(h, axis=-1, keepdims=True) * inv_n
        hc = h - u
        if n_valid != n_pad:
            lane = jax.lax.broadcasted_iota(jnp.int32, h.shape, 1)
            hc = jnp.where(lane < n_valid, hc, 0.0)     # mask pad cols in var
        s = jnp.sum(hc * hc, axis=-1, keepdims=True) * inv_n
        y = hc * jax.lax.rsqrt(s + eps)
        y = p_ref[1:2, :].astype(jnp.float32) * y + p_ref[2:3, :].astype(jnp.float32)
        o_ref[...] = jax.nn.sigmoid(y).astype(o_ref.dtype)


# ---------------------------------------------------------------------------
# One-time parameter prep (hoisted out of the per-call path)
# ---------------------------------------------------------------------------
def prepare_mlp_gate_params(linear_weight, linear_bias, ln_weight, ln_bias,
                            max_single_k=512):
    """Transpose (N, K)->(K, N), pad N to a multiple of 128 (lane-dense
    stores), pad K to a multiple of 128 when large & unaligned (so the
    contraction axis can be tiled without OOB garbage), and pack
    [bias; gamma; beta] into one (3, Np) array.

    Returns (w_kn, packed_params, out_features).
    """
    N, K = linear_weight.shape
    N_pad = _round_up(N, 128)
    K_pad = K if (K % 128 == 0 or K <= max_single_k) else _round_up(K, 128)

    w = jnp.asarray(linear_weight).T                     # (K, N)
    if (K_pad, N_pad) != (K, N):
        w = jnp.pad(w, ((0, K_pad - K), (0, N_pad - N)))

    def _pad_row(v):
        v = jnp.asarray(v).reshape(1, N)
        return jnp.pad(v, ((0, 0), (0, N_pad - N))) if N_pad != N else v

    packed = jnp.concatenate(
        [_pad_row(linear_bias), _pad_row(ln_weight), _pad_row(ln_bias)], axis=0)
    return w, packed, N


# ---------------------------------------------------------------------------
# Forward wrapper
# ---------------------------------------------------------------------------
def mlp_gate_pallas(hidden_states, w_kn, packed_params, *, n_valid, eps=1e-5,
                    tile_rows=None):
    """Fused MLP_gate forward: sigmoid(LayerNorm(x @ W + b)).

    hidden_states : (..., hidden)
    w_kn          : (K_pad, N_pad) pre-transposed / pre-padded linear weight
    packed_params : (3, N_pad)  [linear bias; ln gamma; ln beta]
    n_valid       : true out_features (<= N_pad)
    """
    orig_shape = hidden_states.shape
    K = orig_shape[-1]
    K_pad, N_pad = w_kn.shape
    assert K <= K_pad, "input hidden dim larger than prepared weight"

    n_rows = 1
    for d in orig_shape[:-1]:
        n_rows *= d
    x2 = hidden_states.reshape(n_rows, K)
    if K_pad != K:
        x2 = jnp.pad(x2, ((0, 0), (0, K_pad - K)))       # zeros: no effect on x@W

    out_dtype = hidden_states.dtype
    x_bytes = x2.dtype.itemsize
    w_bytes = w_kn.dtype.itemsize
    o_bytes = jnp.dtype(out_dtype).itemsize
    use_scratch = jnp.dtype(out_dtype) != jnp.dtype(jnp.float32)

    budget = _vmem_budget_bytes()

    # ---- K tile -----------------------------------------------------------
    # If the whole (padded) weight fits in ~1/3 of the VMEM budget, keep it
    # resident: a single K block with a constant block index is DMA'd once
    # for the whole kernel.  Otherwise stream K in 512/256/128 tiles.
    if K_pad % 128 != 0:                                 # small unaligned K
        tk = K_pad
    elif 2 * K_pad * N_pad * w_bytes <= budget // 3:
        tk = K_pad                                       # W resident
    else:
        tk = 512 if K_pad % 512 == 0 else (256 if K_pad % 256 == 0 else 128)

    # ---- row tile -----------------------------------------------------------
    row_mult = {4: 8, 2: 16, 1: 32}.get(x_bytes, 8)
    target_tr = 1024 if budget >= 96 * 1024 * 1024 else 256   # v5e/v6e vs v7x
    if tile_rows is not None:
        target_tr = tile_rows
    tr = min(target_tr, _round_up(n_rows, row_mult))
    tr = max(row_mult, _round_up(tr, row_mult))
    # When W is fetched only once (tk == K_pad), splitting rows is free of
    # extra W traffic: ensure >= 2 row tiles so both v7x TensorCores get work.
    if tk == K_pad and n_rows > row_mult and _cdiv(n_rows, tr) == 1:
        tr = max(row_mult, _round_up(_cdiv(n_rows, 2), row_mult))

    # ---- fit the double-buffered working set into the VMEM budget -----------
    def vmem_usage(tr_, tk_):
        return (2 * tr_ * tk_ * x_bytes                 # x (double buffered)
                + 2 * tk_ * N_pad * w_bytes             # W (double buffered)
                + 2 * 8 * N_pad * 4                     # params (sublane pad)
                + 2 * tr_ * N_pad * o_bytes             # out (double buffered)
                + (tr_ * N_pad * 4 if use_scratch else 0))

    tk_candidates = [tk]
    if K_pad % 128 == 0:
        tk_candidates += [t for t in (512, 256, 128) if t < tk and K_pad % t == 0]
    ci = 0
    while vmem_usage(tr, tk_candidates[ci]) > budget:
        if ci + 1 < len(tk_candidates):
            ci += 1                     # shrink K tile first (W traffic unchanged)
        elif tr > row_mult:
            tr = max(row_mult, _round_up(tr // 2, row_mult))
        else:
            break
    tk = tk_candidates[ci]

    grid = (_cdiv(n_rows, tr), K_pad // tk)
    kernel = functools.partial(_mlp_gate_kernel, eps=eps, n_valid=n_valid)
    scratch_shapes = [pltpu.VMEM((tr, N_pad), jnp.float32)] if use_scratch else []

    out = pl.pallas_call(
        kernel,
        out_shape=jax.ShapeDtypeStruct((n_rows, N_pad), out_dtype),
        grid_spec=pltpu.PrefetchScalarGridSpec(
            num_scalar_prefetch=0,
            grid=grid,
            in_specs=[
                pl.BlockSpec((tr, tk), lambda i, k: (i, k)),     # x
                pl.BlockSpec((tk, N_pad), lambda i, k: (k, 0)),  # W (K, N)
                pl.BlockSpec((3, N_pad), lambda i, k: (0, 0)),   # bias/gamma/beta
            ],
            out_specs=pl.BlockSpec((tr, N_pad), lambda i, k: (i, 0)),
            scratch_shapes=scratch_shapes,
        ),
        compiler_params=pltpu.CompilerParams(
            dimension_semantics=("parallel", "arbitrary"),
            vmem_limit_bytes=int(budget),
        ),
    )(x2, w_kn, packed_params)

    if N_pad != n_valid:
        out = out[:, :n_valid]
    return out.reshape(orig_shape[:-1] + (n_valid,))


def make_mlp_gate(linear_weight, linear_bias, ln_weight, ln_bias, eps=1e-5):
    """Build a jit-friendly forward fn with parameter prep done exactly once."""
    w_kn, packed, n = prepare_mlp_gate_params(linear_weight, linear_bias,
                                              ln_weight, ln_bias)

    def forward(hidden_states):
        return mlp_gate_pallas(hidden_states, w_kn, packed,
                               n_valid=n, eps=eps)

    return forward


if __name__ == "__main__":
    key = jax.random.PRNGKey(0)
    batch, seq, hidden = 2, 8, 32
    out_features = hidden          # MLP_gate default: out_features = hidden_size
    eps = 1e-5

    kx, kw, kb = jax.random.split(key, 3)
    x = jax.random.normal(kx, (batch, seq, hidden), dtype=jnp.float32)
    # nn.Linear params (PyTorch layout: weight (out, in))
    lin_w = jax.random.normal(kw, (out_features, hidden), dtype=jnp.float32) * 0.1
    lin_b = jax.random.normal(kb, (out_features,), dtype=jnp.float32) * 0.1
    # LayerNorm params (module init: ones / zeros)
    ln_w = jnp.ones((out_features,), dtype=jnp.float32)
    ln_b = jnp.zeros((out_features,), dtype=jnp.float32)

    fwd = jax.jit(make_mlp_gate(lin_w, lin_b, ln_w, ln_b, eps=eps))
    out = jax.block_until_ready(fwd(x))

    # ---- pure-JAX reference (matches the PyTorch forward) -------------------
    h = x @ lin_w.T + lin_b
    u = jnp.mean(h, axis=-1, keepdims=True)
    s = jnp.mean((h - u) ** 2, axis=-1, keepdims=True)
    hn = ln_w * ((h - u) / jnp.sqrt(s + eps)) + ln_b
    ref = jax.nn.sigmoid(hn)

    assert out.shape == (batch, seq, out_features)
    assert out.dtype == x.dtype
    max_err = float(jnp.max(jnp.abs(out - ref)))
    # Tolerance covers MXU default-precision f32 matmul vs XLA's reference dot.
    assert max_err < 2e-3, max_err
    print("KERNEL_OK")
</pallas_src>

<mosaic_0001>
module attributes {stable_mosaic.version = 11 : i64} {
  func.func @_mlp_gate_kernel(%arg0: i32, %arg1: i32, %arg2: memref<8x32xf32, #tpu.memory_space<vmem>>, %arg3: memref<32x128xf32, #tpu.memory_space<vmem>>, %arg4: memref<3x128xf32, #tpu.memory_space<vmem>>, %arg5: memref<8x128xf32, #tpu.memory_space<vmem>>) attributes {dimension_semantics = [#tpu.dimension_semantics<parallel>, #tpu.dimension_semantics<arbitrary>], iteration_bounds = array<i64: 2, 1>, scalar_prefetch = 0 : i64, scratch_operands = 0 : i64, tpu.core_type = #tpu.core_type<tc>, window_params = [{transform_indices = @transform_0, window_bounds = array<i64: 8, 32>}, {transform_indices = @transform_1, window_bounds = array<i64: 32, 128>}, {pipeline_mode = #tpu.pipeline_mode<synchronous>, transform_indices = @transform_2, window_bounds = array<i64: 3, 128>}, {transform_indices = @transform_3, window_bounds = array<i64: 8, 128>}]} {
    %c0 = arith.constant 0 : index
    %c0_0 = arith.constant 0 : index
    %0 = vector.load %arg2[%c0, %c0_0] : memref<8x32xf32, #tpu.memory_space<vmem>>, vector<8x32xf32>
    %c0_1 = arith.constant 0 : index
    %c0_2 = arith.constant 0 : index
    %1 = vector.load %arg3[%c0_1, %c0_2] : memref<32x128xf32, #tpu.memory_space<vmem>>, vector<32x128xf32>
    %cst = arith.constant dense<0.000000e+00> : vector<8x128xf32>
    %2 = tpu.matmul %0, %1, %cst {dimension_numbers = #tpu.dot_dimension_numbers<[1], [0], [0], [1], [0, 0, 1, 1], [], []>} : vector<8x32xf32>, vector<32x128xf32>, vector<8x128xf32> -> vector<8x128xf32>
    %c0_i32 = arith.constant 0 : i32
    %3 = arith.cmpi eq, %arg1, %c0_i32 : i32
    %4 = arith.extui %3 : i1 to i32
    %c0_i32_3 = arith.constant 0 : i32
    %5 = arith.cmpi ne, %4, %c0_i32_3 : i32
    scf.if %5 {
      %c0_8 = arith.constant 0 : index
      %c0_9 = arith.constant 0 : index
      %12 = vector.load %arg5[%c0_8, %c0_9] : memref<8x128xf32, #tpu.memory_space<vmem>>, vector<8x128xf32>
      tpu.vector_store %arg5[%c0_8, %c0_9], %2 {strides = array<i32>} : memref<8x128xf32, #tpu.memory_space<vmem>>, vector<8x128xf32>,
    } else {
    }
    %c0_i32_4 = arith.constant 0 : i32
    %6 = arith.cmpi sgt, %arg1, %c0_i32_4 : i32
    %7 = arith.extui %6 : i1 to i32
    %c0_i32_5 = arith.constant 0 : i32
    %8 = arith.cmpi ne, %7, %c0_i32_5 : i32
    scf.if %8 {
      %c0_8 = arith.constant 0 : index
      %c0_9 = arith.constant 0 : index
      %12 = vector.load %arg5[%c0_8, %c0_9] : memref<8x128xf32, #tpu.memory_space<vmem>>, vector<8x128xf32>
      %13 = arith.addf %12, %2 : vector<8x128xf32>
      %c0_10 = arith.constant 0 : index
      %c0_11 = arith.constant 0 : index
      %14 = vector.load %arg5[%c0_10, %c0_11] : memref<8x128xf32, #tpu.memory_space<vmem>>, vector<8x128xf32>
      tpu.vector_store %arg5[%c0_10, %c0_11], %13 {strides = array<i32>} : memref<8x128xf32, #tpu.memory_space<vmem>>, vector<8x128xf32>,
    } else {
    }
    %c0_i32_6 = arith.constant 0 : i32
    %9 = arith.cmpi eq, %arg1, %c0_i32_6 : i32
    %10 = arith.extui %9 : i1 to i32
    %c0_i32_7 = arith.constant 0 : i32
    %11 = arith.cmpi ne, %10, %c0_i32_7 : i32
    scf.if %11 {
      %c0_8 = arith.constant 0 : index
      %c0_9 = arith.constant 0 : index
      %12 = vector.load %arg5[%c0_8, %c0_9] : memref<8x128xf32, #tpu.memory_space<vmem>>, vector<8x128xf32>
      %c0_10 = arith.constant 0 : index
      %c0_11 = arith.constant 0 : index
      %13 = vector.load %arg4[%c0_10, %c0_11] : memref<3x128xf32, #tpu.memory_space<vmem>>, vector<1x128xf32>
      %14 = vector.broadcast %13 : vector<1x128xf32> to vector<8x128xf32>
      %15 = arith.addf %12, %14 : vector<8x128xf32>
      %cst_12 = arith.constant dense<0.000000e+00> : vector<8xf32>
      %16 = vector.multi_reduction <add>, %15, %cst_12 [1] : vector<8x128xf32> to vector<8xf32>
      %17 = vector.shape_cast %16 : vector<8xf32> to vector<8x1xf32>
      %cst_13 = arith.constant 3.125000e-02 : f32
      %18 = vector.broadcast %cst_13 : f32 to vector<8x1xf32>
      %19 = arith.mulf %17, %18 : vector<8x1xf32>
      %20 = vector.broadcast %19 : vector<8x1xf32> to vector<8x128xf32>
      %21 = arith.subf %15, %20 : vector<8x128xf32>
      %22 = tpu.iota {dimensions = array<i32: 1>} : vector<8x128xi32>
      %c32_i32 = arith.constant 32 : i32
      %23 = vector.broadcast %c32_i32 : i32 to vector<8x128xi32>
      %24 = arith.cmpi slt, %22, %23 : vector<8x128xi32>
      %cst_14 = arith.constant 0.000000e+00 : f32
      %25 = vector.broadcast %cst_14 : f32 to vector<8x128xf32>
      %26 = arith.select %24, %21, %25 : vector<8x128xi1>, vector<8x128xf32>
      %27 = arith.mulf %26, %26 : vector<8x128xf32>
      %cst_15 = arith.constant dense<0.000000e+00> : vector<8xf32>
      %28 = vector.multi_reduction <add>, %27, %cst_15 [1] : vector<8x128xf32> to vector<8xf32>
      %29 = vector.shape_cast %28 : vector<8xf32> to vector<8x1xf32>
      %cst_16 = arith.constant 3.125000e-02 : f32
      %30 = vector.broadcast %cst_16 : f32 to vector<8x1xf32>
      %31 = arith.mulf %29, %30 : vector<8x1xf32>
      %cst_17 = arith.constant 9.99999974E-6 : f32
      %32 = vector.broadcast %cst_17 : f32 to vector<8x1xf32>
      %33 = arith.addf %31, %32 : vector<8x1xf32>
      %34 = math.rsqrt %33 : vector<8x1xf32>
      %35 = vector.broadcast %34 : vector<8x1xf32> to vector<8x128xf32>
      %36 = arith.mulf %26, %35 : vector<8x128xf32>
      %c1 = arith.constant 1 : index
      %c0_18 = arith.constant 0 : index
      %37 = vector.load %arg4[%c1, %c0_18] : memref<3x128xf32, #tpu.memory_space<vmem>>, vector<1x128xf32>
      %38 = vector.broadcast %37 : vector<1x128xf32> to vector<8x128xf32>
      %39 = arith.mulf %38, %36 : vector<8x128xf32>
      %c2 = arith.constant 2 : index
      %c0_19 = arith.constant 0 : index
      %40 = vector.load %arg4[%c2, %c0_19] : memref<3x128xf32, #tpu.memory_space<vmem>>, vector<1x128xf32>
      %41 = vector.broadcast %40 : vector<1x128xf32> to vector<8x128xf32>
      %42 = arith.addf %39, %41 : vector<8x128xf32>
      %43 = arith.negf %42 : vector<8x128xf32>
      %44 = math.exp %43 : vector<8x128xf32>
      %cst_20 = arith.constant 1.000000e+00 : f32
      %45 = vector.broadcast %cst_20 : f32 to vector<8x128xf32>
      %46 = arith.addf %45, %44 : vector<8x128xf32>
      %47 = arith.divf %45, %46 : vector<8x128xf32>
      %c0_21 = arith.constant 0 : index
      %c0_22 = arith.constant 0 : index
      %48 = vector.load %arg5[%c0_21, %c0_22] : memref<8x128xf32, #tpu.memory_space<vmem>>, vector<8x128xf32>
      tpu.vector_store %arg5[%c0_21, %c0_22], %47 {strides = array<i32>} : memref<8x128xf32, #tpu.memory_space<vmem>>, vector<8x128xf32>,
    } else {
    }
    return
  }
  func.func @transform_0(%arg0: i32, %arg1: i32) -> (i32, i32) {
    %c0_i32 = arith.constant 0 : i32
    return %arg0, %arg1 : i32, i32
  }
  func.func @transform_1(%arg0: i32, %arg1: i32) -> (i32, i32) {
    %c0_i32 = arith.constant 0 : i32
    %c0_i32_0 = arith.constant 0 : i32
    return %arg1, %c0_i32 : i32, i32
  }
  func.func @transform_2(%arg0: i32, %arg1: i32) -> (i32, i32) {
    %c0_i32 = arith.constant 0 : i32
    %c0_i32_0 = arith.constant 0 : i32
    %c0_i32_1 = arith.constant 0 : i32
    return %c0_i32, %c0_i32_0 : i32, i32
  }
  func.func @transform_3(%arg0: i32, %arg1: i32) -> (i32, i32) {
    %c0_i32 = arith.constant 0 : i32
    %c0_i32_0 = arith.constant 0 : i32
    return %arg0, %c0_i32 : i32, i32
  }
}

</mosaic_0001>

<llo_original>
// kernel: forward.1
$region0: #{forward.1}
  #allocation0 [shape = 'u32[]', space=smem, size = 0x4, offset = 0x4, fixed_abs, tag = 'smem constant byte address 0x4 - core index']
  #allocation1 [shape = 'u32[72,128]{1,0:T(1,128)}', space=vmem, size = 0x9000, scoped, tag = 'internal scratch']
  %s0 = inlined_call_operand.hbm [shape: f32[16,32], index: 0, kind: input, shape index: {}]
  %s1 = inlined_call_operand.hbm [shape: f32[32,128], index: 1, kind: input, shape index: {}]
  %s2 = inlined_call_operand.hbm [shape: f32[3,128], index: 2, kind: input, shape index: {}]
  %s3 = inlined_call_operand.vmem [shape: f32[16,128], index: 3, kind: output, shape index: {}]
  %s4 = sld [smem:[#allocation0]]
  $region69: #{forward.1} parent=0
    _
  %s6 = ssub.s32 1, %s4
  %s7 = scalar_select 0, %s6, %s4
  $region1: #{forward.1} parent=0
    #allocation2 [shape = 'u8[8192]{0}', space=vmem, size = 0x2000, scoped, tag = 'input window, operand 0']
    #allocation3 [shape = 's32[2]{0}', space=sflag, size = 0x8, scoped, tag = 'scoped memory for forward.1']
    #allocation4 [shape = 'u8[16384]{0}', space=vmem, size = 0x4000, scoped, tag = 'input window, operand 1, single buffered']
    #allocation5 [shape = 's32[1]{0}', space=sflag, size = 0x4, scoped, tag = 'scoped memory for forward.1']
    #allocation6 [shape = 'u8[2048]{0}', space=vmem, size = 0x800, scoped, tag = 'input window, operand 2, single buffered']
    %8 = vsyncpa [#allocation3], 0
    %s9 = scalar_lea.sflag [#allocation3], 1
    %10 = vsyncpa %s9, 0
    %11 = vsyncpa [#allocation5], 0
    loop: start=0, step=1, limit=4
    $region2: #{forward.1} parent=1 // loop_pre_header
      _
    $region3: #{forward.1} parent=1 // loop_header
      %s13 = sphi 0, %s17
      %p14 = scmp.ge.s32.totalorder %s13, 4
      %s20 = sphi 0, %s32
      %s21 = sphi 0, %s28
      %s22 = sphi 0, %s20
      %s23 = sphi 0, %s21
      %s24 = sphi 0, %s22
      %s25 = sphi 0, %s23
      %s37 = sphi 0, %s39
      %s40 = sphi 0, %s37
      %s41 = sphi 0, %s40
      %s57 = sphi 0, %s41
      %s63 = sphi 0, %s65
      %s66 = sphi 0, %s63
      %s67 = sphi 0, %s66
      %s83 = sphi 0, %s67
      %s87 = sphi 0, %s87
      %s89 = sphi 0, %s87
      %s90 = sphi 0, %s89
      %s104 = sphi 0, %s90
      %s110 = sphi 0, %s112
      %s113 = sphi 0, %s110
      %s114 = sphi 0, %s113
      %s130 = sphi 0, %s114
    $region4: #{forward.1} parent=1 // loop_header_branch
      %16 = sbr.rel (%p14) target = $region8
    $region5: #{forward.1} parent=1 // loop_body
      %s18 = ssub.s32 %s13, 1
      %s19 = ssub.s32 %s13, 2
      %s26 = sadd.s32 1, %s21
      %p27 = scmp.ge.s32.totalorder %s26, 1
      %s28 = scalar_select %p27, 0, %s26
      %s29 = sadd.s32 1, %s20
      %s30 = scalar_select %p27, %s29, %s20
      %p31 = scmp.ge.s32.totalorder %s30, 2
      %s32 = scalar_select %p31, 0, %s30
      %s33 = ssub.s32 %s20, %s32
      %s34 = ssub.s32 %s21, %s28
      %s35 = sor.u32 %s33, %s34
      %p36 = scmp.eq.s32.totalorder %s35, 0
      %s38 = sadd.s32 %s37, 1
      %s39 = scalar_select %p36, %s37, %s38
      %p42 = pneg %p36
      %p43 = scmp.eq.s32.totalorder %s13, 1
      %p44 = por %p42, %p43
      %p45 = scmp.ne.s32.totalorder %s37, %s40
      %p46 = scmp.eq.s32.totalorder %s13, 0
      %p47 = por %p45, %p46
      %p48 = scmp.ne.s32.totalorder %s37, %s40
      %p49 = scmp.eq.s32.totalorder %s18, 1
      %p50 = por %p48, %p49
      %p51 = scmp.ne.s32.totalorder %s40, %s41
      %p52 = scmp.eq.s32.totalorder %s18, 0
      %p53 = por %p51, %p52
      %p54 = scmp.ne.s32.totalorder %s40, %s41
      %p55 = scmp.eq.s32.totalorder %s19, 1
      %p56 = por %p54, %p55
      %p58 = scmp.ne.s32.totalorder %s41, %s57
      %p59 = scmp.eq.s32.totalorder %s19, 0
      %p60 = por %p58, %p59
      %s61 = ssub.s32 %s21, %s28
      %p62 = scmp.eq.s32.totalorder %s61, 0
      %s64 = sadd.s32 %s63, 1
      %s65 = scalar_select %p62, %s63, %s64
      %p68 = pneg %p62
      %p69 = scmp.eq.s32.totalorder %s13, 1
      %p70 = por %p68, %p69
      %p71 = scmp.ne.s32.totalorder %s63, %s66
      %p72 = scmp.eq.s32.totalorder %s13, 0
      %p73 = por %p71, %p72
      %p74 = scmp.ne.s32.totalorder %s63, %s66
      %p75 = scmp.eq.s32.totalorder %s18, 1
      %p76 = por %p74, %p75
      %p77 = scmp.ne.s32.totalorder %s66, %s67
      %p78 = scmp.eq.s32.totalorder %s18, 0
      %p79 = por %p77, %p78
      %p80 = scmp.ne.s32.totalorder %s66, %s67
      %p81 = scmp.eq.s32.totalorder %s19, 1
      %p82 = por %p80, %p81
      %p84 = scmp.ne.s32.totalorder %s67, %s83
      %p85 = scmp.eq.s32.totalorder %s19, 0
      %p86 = por %p84, %p85
      %s88 = sadd.s32 %s87, 1
      %p91 = scmp.eq.s32.totalorder %s13, 1
      %p92 = scmp.ne.s32.totalorder %s87, %s89
      %p93 = scmp.eq.s32.totalorder %s13, 0
      %p94 = por %p92, %p93
      %p95 = scmp.ne.s32.totalorder %s87, %s89
      %p96 = scmp.eq.s32.totalorder %s18, 1
      %p97 = por %p95, %p96
      %p98 = scmp.ne.s32.totalorder %s89, %s90
      %p99 = scmp.eq.s32.totalorder %s18, 0
      %p100 = por %p98, %p99
      %p101 = scmp.ne.s32.totalorder %s89, %s90
      %p102 = scmp.eq.s32.totalorder %s19, 1
      %p103 = por %p101, %p102
      %p105 = scmp.ne.s32.totalorder %s90, %s104
      %p106 = scmp.eq.s32.totalorder %s19, 0
      %p107 = por %p105, %p106
      %s108 = ssub.s32 %s20, %s32
      %p109 = scmp.eq.s32.totalorder %s108, 0
      %s111 = sadd.s32 %s110, 1
      %s112 = scalar_select %p109, %s110, %s111
      %p115 = pneg %p109
      %p116 = scmp.eq.s32.totalorder %s13, 1
      %p117 = por %p115, %p116
      %p118 = scmp.ne.s32.totalorder %s110, %s113
      %p119 = scmp.eq.s32.totalorder %s13, 0
      %p120 = por %p118, %p119
      %p121 = scmp.ne.s32.totalorder %s110, %s113
      %p122 = scmp.eq.s32.totalorder %s18, 1
      %p123 = por %p121, %p122
      %p124 = scmp.ne.s32.totalorder %s113, %s114
      %p125 = scmp.eq.s32.totalorder %s18, 0
      %p126 = por %p124, %p125
      %p127 = scmp.ne.s32.totalorder %s113, %s114
      %p128 = scmp.eq.s32.totalorder %s19, 1
      %p129 = por %p127, %p128
      %p131 = scmp.ne.s32.totalorder %s114, %s130
      %p132 = scmp.eq.s32.totalorder %s19, 0
      %p133 = por %p131, %p132
      %p134 = scmp.le.s32.totalorder 1, %s13
      %p135 = scmp.lt.s32.totalorder %s13, 3
      %p136 = pnand %p134, %p135
      %p137 = pneg %p136
      // Predicated region
      $region9: #{forward.1} parent=5 // pred_check
        _
      $region10: #{forward.1} parent=5 // pred_check_branch
        %139 = sbr.rel (%p136) target = $region12
      $region11: #{forward.1} parent=5 // pred_region
        %s140 = ssub.s32 %s13, 1
        // Predicated region
        $region13: #{forward.1} parent=11 // pred_check
          %p141 = pneg %p79
        $region14: #{forward.1} parent=11 // pred_check_branch
          %143 = sbr.rel (%p141) target = $region16
        $region15: #{forward.1} parent=11 // pred_region
          %s144 = smul.u32 4, %s23
          %146 = vsyncadd [#allocation5], 0
          %s147 = smul.addr %s144, 8
          %s148 = scalar_lea.hbm %s1, %s147
          %s149 = sshll.u32 %s148, 4
          %s150 = int_to_ptr.hbm [resolvable:$true] %s149
          %s151 = sshll.u32 [#allocation4], 4
          %s152 = int_to_ptr.vmem [resolvable:$true] %s151
          %157 = dma.hbm_to_vmem [thread:$0]  %s150, 512, %s152, [#allocation5], 128, 128, 8
        $region16: #{forward.1} parent=11 // pred_fallthru
          _
        // Predicated region
        $region17: #{forward.1} parent=11 // pred_check
          %p158 = pneg %p100
        $region18: #{forward.1} parent=11 // pred_check_branch
          %160 = sbr.rel (%p158) target = $region20
        $region19: #{forward.1} parent=11 // pred_region
          %162 = vsyncadd [#allocation5], 0
          %s164 = sshll.u32 %s2, 4
          %s165 = int_to_ptr.hbm [resolvable:$true] %s164
          %s166 = sshll.u32 [#allocation6], 4
          %s167 = int_to_ptr.vmem [resolvable:$true] %s166
          %169 = dma.hbm_to_vmem [thread:$0]  %s165, 64, %s167, [#allocation5]
        $region20: #{forward.1} parent=11 // pred_fallthru
          _
      $region12: #{forward.1} parent=5 // pred_fallthru
        _
      %p170 = scmp.lt.s32.totalorder %s13, 2
      // Predicated region
      $region21: #{forward.1} parent=5 // pred_check
        %p171 = pneg %p170
      $region22: #{forward.1} parent=5 // pred_check_branch
        %173 = sbr.rel (%p171) target = $region24
      $region23: #{forward.1} parent=5 // pred_region
        // Predicated region
        $region25: #{forward.1} parent=23 // pred_check
          %p174 = pneg %p47
        $region26: #{forward.1} parent=23 // pred_check_branch
          %176 = sbr.rel (%p174) target = $region28
        $region27: #{forward.1} parent=23 // pred_region
          %s177 = sand.u32 %s37, 1
          %s178 = scalar_lea.sflag [#allocation3], %s177
          %s179 = sand.u32 %s37, 1
          %s180 = smul.addr %s179, 8
          %s181 = scalar_lea.vmem [#allocation2], %s180
          %183 = vsyncadd %s178, 0
          %s184 = sadd.s32 %s21, %s20
          %s185 = smul.addr %s184, 8
          %s186 = scalar_lea.hbm %s0, %s185
          %s188 = sshll.u32 %s186, 4
          %s189 = int_to_ptr.hbm [resolvable:$true] %s188
          %s190 = sshll.u32 %s181, 4
          %s191 = int_to_ptr.vmem [resolvable:$true] %s190
          %193 = dma.hbm_to_vmem [thread:$0]  %s189, 128, %s191, %s178
        $region28: #{forward.1} parent=23 // pred_fallthru
          _
      $region24: #{forward.1} parent=5 // pred_fallthru
        _
      %p194 = scmp.le.s32.totalorder 1, %s13
      %p195 = scmp.lt.s32.totalorder %s13, 3
      %p196 = pnand %p194, %p195
      %p197 = pneg %p196
      // Predicated region
      $region29: #{forward.1} parent=5 // pred_check
        _
      $region30: #{forward.1} parent=5 // pred_check_branch
        %199 = sbr.rel (%p196) target = $region32
      $region31: #{forward.1} parent=5 // pred_region
        %s200 = ssub.s32 %s13, 1
        %s201 = sand.u32 %s40, 1
        %s202 = scalar_lea.sflag [#allocation3], %s201
        %s203 = sand.u32 %s40, 1
        %s204 = smul.addr %s203, 8
        %s205 = scalar_lea.vmem [#allocation2], %s204
        // Predicated region
        $region33: #{forward.1} parent=31 // pred_check
          %p206 = pneg %p53
        $region34: #{forward.1} parent=31 // pred_check_branch
          %208 = sbr.rel (%p206) target = $region36
        $region35: #{forward.1} parent=31 // pred_region
          %210 = dma.done %s202, 128
        $region36: #{forward.1} parent=31 // pred_fallthru
          _
        // Predicated region
        $region37: #{forward.1} parent=31 // pred_check
          %p211 = pneg %p79
        $region38: #{forward.1} parent=31 // pred_check_branch
          %213 = sbr.rel (%p211) target = $region40
        $region39: #{forward.1} parent=31 // pred_region
          %215 = dma.done [#allocation5], 512
        $region40: #{forward.1} parent=31 // pred_fallthru
          _
        // Predicated region
        $region41: #{forward.1} parent=31 // pred_check
          %p216 = pneg %p100
        $region42: #{forward.1} parent=31 // pred_check_branch
          %218 = sbr.rel (%p216) target = $region44
        $region43: #{forward.1} parent=31 // pred_region
          %220 = dma.done [#allocation5], 64
        $region44: #{forward.1} parent=31 // pred_fallthru
          _
        %s221 = sand.u32 %s40, 1
        %s222 = scalar_lea.sflag [#allocation3], %s221
        %s223 = sand.u32 %s40, 1
        %s224 = smul.addr %s223, 8
        %s225 = scalar_lea.vmem [#allocation2], %s224
        %p226 = pneg %p53
        %p227 = pneg %p50
        %p228 = pneg %p79
        %p229 = pneg %p76
        %p230 = pneg %p100
        %p231 = pneg %p97
        %p232 = pneg %p126
        %p233 = pneg %p123
        %p234 = scmp.lt.s32.totalorder %s22, 1
        %s235 = scalar_select %p234, %s22, 1
        %s236 = smul.addr %s235, 8
        %s237 = scalar_lea.vmem %s3, %s236
        %s238 = smul.u32 4, %s23
        %p239 = scmp.lt.s32.totalorder %s22, 1
        %s240 = scalar_select %p239, %s22, 1
        %s241 = smul.addr %s240, 8
        %s242 = scalar_lea.vmem %s3, %s241
        %v243 = vld [vmem:[%s205] sm:$0xff]
        %v244 = vld [vmem:[#allocation4] sm:$0xff]
        %v245 = vld [vmem:[#allocation4 + $0x8] sm:$0xff]
        %v246 = vld [vmem:[#allocation4 + $0x10] sm:$0xff]
        %v247 = vld [vmem:[#allocation4 + $0x18] sm:$0xff]
        %vm248 = vcmask 261120
        %v250 = vsel %vm248, %v243, 0
        %252 = vmatpush.msra.mxu0 0.0
        %253 = vmatpush.msra.mxu0 0.0
        %254 = vmatpush.msra.mxu0 0.0
        %255 = vmatpush.msra.mxu0 0.0
        %256 = vmatpush.msra.mxu0 0.0
        %257 = vmatpush.msra.mxu0 0.0
        %258 = vmatpush.msra.mxu0 0.0
        %259 = vmatpush.msra.mxu0 0.0
        %260 = vmatpush.msra.mxu0 0.0
        %261 = vmatpush.msra.mxu0 0.0
        %262 = vmatpush.msra.mxu0 0.0
        %263 = vmatpush.msra.mxu0 0.0
        %264 = vmatpush.msra.mxu0 %v247
        %265 = vmatpush.msra.mxu0 %v246
        %266 = vmatpush.msra.mxu0 %v245
        %267 = vmatpush.msra.mxu0 %v244
        %268 = vmatmul.f32.gmra.mxu0 %v250
        %v269 = vpop.f32.mrf.mxu0
        %v270 = vadd.f32 0.0, %v269
        %271 = vdwg.mxu0
        %p272 = scmp.eq.s32.totalorder %s23, 0
        // Predicated region
        $region45: #{forward.1} parent=31 // pred_check
          %p273 = pneg %p272
        $region46: #{forward.1} parent=31 // pred_check_branch
          %275 = sbr.rel (%p273) target = $region48
        $region47: #{forward.1} parent=31 // pred_region
          %276 = vst [vmem:[%s242] sm:$0xff] %v270
        $region48: #{forward.1} parent=31 // pred_fallthru
          _
        %p277 = scmp.gt.s32.totalorder %s23, 0
        // Predicated region
        $region49: #{forward.1} parent=31 // pred_check
          %p278 = pneg %p277
        $region50: #{forward.1} parent=31 // pred_check_branch
          %280 = sbr.rel (%p278) target = $region52
        $region51: #{forward.1} parent=31 // pred_region
          %v281 = vld [vmem:[%s242] sm:$0xff]
          %v282 = vadd.f32 %v281, %v270
          %283 = vst [vmem:[%s242] sm:$0xff] %v282
        $region52: #{forward.1} parent=31 // pred_fallthru
          _
        // Predicated region
        $region53: #{forward.1} parent=31 // pred_check
          %p284 = pneg %p272
        $region54: #{forward.1} parent=31 // pred_check_branch
          %286 = sbr.rel (%p284) target = $region56
        $region55: #{forward.1} parent=31 // pred_region
          %v287 = vld [vmem:[%s242] sm:$0xff]
          %v288 = vld [vmem:[#allocation6] sm:$0x1]
          %v289 = vperm.slane %v288, 0
          %v290 = vadd.f32 %v287, %v289
          %291 = vadd.xlane.f32.xlu0 %v290
          %v292 = vpop.xlane.xlu0 %291
          %v293 = vmul.f32 %v292, 0.03125
          %v294 = vsub.f32 %v290, %v293
          %v295 = vlaneseq
          %v296 = vand.u32 %v295, 127
          %vm297 = vcmp.lt.s32.totalorder %v296, 32
          %v298 = vsel %vm297, %v294, 0.0
          %v299 = vmul.f32 %v298, %v298
          %300 = vadd.xlane.f32.xlu0 %v299
          %v301 = vpop.xlane.xlu0 %300
          %v302 = vmul.f32 %v301, 0.03125
          %v303 = vadd.f32 %v302, 1e-05
          %v304 = vrsqrt.pop %v303
          %v305 = vmul.f32 %v304, %v303
          %v306 = vmul.f32 %v305, %v304
          %v307 = vmul.f32 0.5, %v306
          %v308 = vsub.f32 1.5, %v307
          %v309 = vmul.f32 %v304, %v308
          %vm310 = vweird.f32 %v303
          %vm311 = vweird.f32 %v304
          %vm312 = vmor %vm310, %vm311
          %v313 = vsel %vm312, %v304, %v309
          %v314 = vmul.f32 %v298, %v313
          %v315 = vld [vmem:[#allocation6 + $0x1] sm:$0x1]
          %v316 = vperm.slane %v315, 0
          %v317 = vmul.f32 %v316, %v314
          %v318 = vld [vmem:[#allocation6 + $0x2] sm:$0x1]
          %v319 = vperm.slane %v318, 0
          %v320 = vadd.f32 %v317, %v319
          %v321 = vxor.u32 %v320, 2147483648
          %v322 = vmul.f32 %v321, 1.442695
          %v323 = vpow.pop %v322
          %v324 = vadd.f32 %v323, 1.0
          %v325 = vrcp.pop %v324
          %v326 = vmul.f32 %v324, %v325
          %v327 = vsub.f32 1.0, %v326
          %v328 = vmul.f32 %v325, %v327
          %v329 = vadd.f32 %v325, %v328
          %vm330 = vweird.f32 %v324
          %vm331 = vweird.f32 %v325
          %vm332 = vmor %vm330, %vm331
          %v333 = vsel %vm332, %v325, %v329
          %v334 = vand.u32 2147483647, %v324
          %vm335 = vcmp.eq.f32.partialorder %v334, 8.507059e+37
          %v336 = vand.u32 %v324, 2147483648
          %v337 = vor.u32 1.1754944e-38, %v336
          %v338 = vsel %vm335, %v337, %v333
          %v339 = vmul.f32 1.0, %v338
          %340 = vst [vmem:[%s242] sm:$0xff] %v339
        $region56: #{forward.1} parent=31 // pred_fallthru
          _
        %p341 = scmp.lt.s32.totalorder %s22, 1
        %s342 = scalar_select %p341, %s22, 1
        %s343 = smul.addr %s342, 8
        %s344 = scalar_lea.vmem %s3, %s343
        // Predicated region
        $region57: #{forward.1} parent=31 // pred_check
          %p345 = pneg %p123
        $region58: #{forward.1} parent=31 // pred_check_branch
          %347 = sbr.rel (%p345) target = $region60
        $region59: #{forward.1} parent=31 // pred_region
          _
        $region60: #{forward.1} parent=31 // pred_fallthru
          _
      $region32: #{forward.1} parent=5 // pred_fallthru
        _
      %p348 = scmp.le.s32.totalorder 2, %s13
      // Predicated region
      $region61: #{forward.1} parent=5 // pred_check
        %p349 = pneg %p348
      $region62: #{forward.1} parent=5 // pred_check_branch
        %351 = sbr.rel (%p349) target = $region64
      $region63: #{forward.1} parent=5 // pred_region
        %s352 = ssub.s32 %s13, 2
        // Predicated region
        $region65: #{forward.1} parent=63 // pred_check
          %p353 = pneg %p129
        $region66: #{forward.1} parent=63 // pred_check_branch
          %355 = sbr.rel (%p353) target = $region68
        $region67: #{forward.1} parent=63 // pred_region
          %p356 = scmp.lt.s32.totalorder %s24, 1
          %s357 = scalar_select %p356, %s24, 1
          %s358 = smul.addr %s357, 8
          %s359 = scalar_lea.vmem %s3, %s358
        $region68: #{forward.1} parent=63 // pred_fallthru
          _
      $region64: #{forward.1} parent=5 // pred_fallthru
        _
    $region6: #{forward.1} parent=1 // loop_footer
      %s17 = sadd.s32 1, %s13
    $region7: #{forward.1} parent=1 // loop_footer_branch
      %12 = sbr.rel target = $region3
    $region8: #{forward.1} parent=1 // loop_exit
      _
    %360 = vsyncpa [#allocation3], 1
    %s361 = scalar_lea.sflag [#allocation3], 1
    %362 = vsyncpa %s361, 1
    %363 = vsyncpa [#allocation5], 1

</llo_original>
